<compile_context>
chip_gen: v5e
topology: v5e:2x2
jax: 0.10.0
libtpu: 0.0.40
codegen_flags: <defaults>
</compile_context>

<pallas_src>
import functools

import jax
import jax.numpy as jnp
from jax.experimental import pallas as pl
from jax.experimental.pallas import tpu as pltpu

ALPHA = 0.5
GAMMA = 1.0
SMOOTH = 1e-05

LANES = 128


def _focal_weight(bce):
    # (1 - exp(-bce)) ** gamma, specialized for gamma == 1 so Mosaic doesn't
    # lower a float pow as exp(gamma * log(x)).
    w = 1.0 - jnp.exp(-bce)
    if GAMMA != 1.0:
        w = w ** GAMMA
    return w


def _focal_dice_partial_kernel(l_ref, p_ref, out_ref, *,
                               block_rows, n_rows, nt, nt_c, n_splits):
    """Accumulate per-lane partial sums into the resident (32,128) out block.

    Row groups of out_ref:
      [ 0: 8]  sum(l * p)                (dice intersection)
      [ 8:16]  sum(l)
      [16:24]  sum(p)
      [24:32]  sum(focal_weight(bce)*bce)   (ALPHA applied in the wrapper)
    """
    c = pl.program_id(0)
    i = pl.program_id(1)
    blk = c * nt_c + i               # global block index this step handles

    @pl.when(i == 0)
    def _():
        out_ref[...] = jnp.zeros_like(out_ref)

    def acc(row0, x):
        if block_rows % 8 == 0:
            # Stop the per-step reduction at vreg shape: pure VALU adds here,
            # the cross-sublane/lane reduce happens once in the wrapper.
            out_ref[row0:row0 + 8, :] += jnp.sum(
                x.reshape(block_rows // 8, 8, LANES), axis=0)
        else:
            # Single full-array block whose row count isn't a multiple of 8
            # (runs exactly once per call).
            out_ref[row0:row0 + 1, :] += jnp.sum(x, axis=0, keepdims=True)

    def accumulate(mask):
        l = l_ref[...].astype(jnp.float32)
        p = p_ref[...].astype(jnp.float32)
        if mask is not None:
            # jnp.where (not multiply) so garbage/NaN in out-of-bounds rows of
            # the trailing partial block cannot pollute the sums.
            l = jnp.where(mask, l, 0.0)
            p = jnp.where(mask, p, 0.0)
        lp = l * p
        # BCEWithLogits(input=label, target=prediction)
        bce = jnp.maximum(l, 0.0) - lp + jnp.log1p(jnp.exp(-jnp.abs(l)))
        focal = _focal_weight(bce) * bce     # ALPHA applied in the wrapper
        if mask is not None:
            focal = jnp.where(mask, focal, 0.0)
        acc(0, lp)
        acc(8, l)
        acc(16, p)
        acc(24, focal)

    full_blocks = n_rows // block_rows
    has_partial = (n_rows % block_rows) != 0
    has_pad_iters = (n_splits * nt_c) != nt   # grid padding iterations exist

    if not (has_partial or has_pad_iters):
        # All blocks full and no padding iterations: mask-free hot loop.
        accumulate(None)
    else:
        @pl.when(blk < full_blocks)
        def _():
            accumulate(None)

        if has_partial:
            @pl.when(blk == full_blocks)   # single trailing partial block
            def _():
                row = jax.lax.broadcasted_iota(
                    jnp.int32, (block_rows, LANES), 0)
                accumulate(row < (n_rows - full_blocks * block_rows))
        # Padding iterations (blk >= nt) fall through with no accumulation.


def focal_dice_loss(label, prediction, *, block_rows=8192):
    """label, prediction: same shape (e.g. NCHW). Returns scalar f32 loss.

    block_rows=8192 -> 4 MiB f32 per input block (16 MiB double-buffered for
    both inputs); vmem_limit_bytes is raised accordingly so this also holds on
    v5e. bf16 inputs can be passed directly (cast happens in VMEM), halving
    HBM traffic on mem-bound chips.
    """
    assert label.shape == prediction.shape
    n = int(label.size)
    assert n > 0

    l = jnp.ravel(label)
    p = jnp.ravel(prediction)

    n_main = (n // LANES) * LANES
    tail = n - n_main

    inter = jnp.float32(0.0)
    sum_l = jnp.float32(0.0)
    sum_p = jnp.float32(0.0)
    sum_f = jnp.float32(0.0)

    if n_main:
        # TODO(synk): for lane-unaligned n this prefix slice can still
        # materialize one copy per input in eager mode; a 1-D-blocked variant
        # could remove it. The common aligned case takes no copy at all.
        lm = l[:n_main] if tail else l
        pm = p[:n_main] if tail else p
        rows = n_main // LANES
        l2 = lm.reshape(rows, LANES)
        p2 = pm.reshape(rows, LANES)

        if rows <= block_rows:
            br = rows                          # full-array block, always legal
        else:
            br = max(8, (block_rows // 8) * 8)  # keep (8,128) divisibility
        nt = -(-rows // br)                    # total valid blocks
        n_splits = 2 if nt >= 2 else 1         # feeds both TCs on v7x
        nt_c = -(-nt // n_splits)              # blocks per split

        if n_splits * nt_c == nt:
            in_idx = lambda c, i: (c * nt_c + i, 0)
        else:
            last_blk = nt - 1                  # clamp padding iterations
            in_idx = lambda c, i: (jnp.minimum(c * nt_c + i, last_blk), 0)

        kernel = functools.partial(
            _focal_dice_partial_kernel,
            block_rows=br, n_rows=rows, nt=nt, nt_c=nt_c, n_splits=n_splits)

        itemsize = l2.dtype.itemsize
        inp_bytes = 2 * 2 * br * LANES * itemsize   # 2 inputs, double-buffered
        vmem_limit = int(min(max(inp_bytes + (2 << 20), 24 << 20), 60 << 20))

        cost = pl.CostEstimate(flops=12 * n_main, transcendentals=3 * n_main,
                               bytes_accessed=2 * itemsize * n_main)

        partial = pl.pallas_call(
            kernel,
            out_shape=jax.ShapeDtypeStruct((n_splits, 32, LANES), jnp.float32),
            grid_spec=pltpu.PrefetchScalarGridSpec(
                num_scalar_prefetch=0,
                grid=(n_splits, nt_c),
                in_specs=[
                    pl.BlockSpec((br, LANES), in_idx),
                    pl.BlockSpec((br, LANES), in_idx),
                ],
                out_specs=pl.BlockSpec((None, 32, LANES),
                                       lambda c, i: (c, 0, 0)),
            ),
            compiler_params=pltpu.CompilerParams(
                dimension_semantics=("parallel", "arbitrary"),
                vmem_limit_bytes=vmem_limit,
            ),
            cost_estimate=cost,
        )(l2, p2)

        sums = jnp.sum(partial.reshape(n_splits, 4, 8, LANES), axis=(0, 2, 3))
        inter = inter + sums[0]
        sum_l = sum_l + sums[1]
        sum_p = sum_p + sums[2]
        sum_f = sum_f + sums[3]

    if tail:
        # < 128 trailing elements: fold in with plain jnp (no pad, no copy of
        # the main body).
        lt = l[n_main:].astype(jnp.float32)
        pt = p[n_main:].astype(jnp.float32)
        lpt = lt * pt
        bce_t = jnp.maximum(lt, 0.0) - lpt + jnp.log1p(jnp.exp(-jnp.abs(lt)))
        inter = inter + jnp.sum(lpt)
        sum_l = sum_l + jnp.sum(lt)
        sum_p = sum_p + jnp.sum(pt)
        sum_f = sum_f + jnp.sum(_focal_weight(bce_t) * bce_t)

    dice = 1.0 - (2.0 * inter + SMOOTH) / (sum_l + sum_p + SMOOTH)
    focal_mean = ALPHA * sum_f / jnp.float32(n)
    return dice + focal_mean


def _reference(label, prediction):
    l = jnp.ravel(label).astype(jnp.float32)
    p = jnp.ravel(prediction).astype(jnp.float32)
    inter = jnp.sum(l * p)
    dice = 1.0 - (2.0 * inter + SMOOTH) / (jnp.sum(l) + jnp.sum(p) + SMOOTH)
    bce = jnp.maximum(l, 0.0) - l * p + jnp.log1p(jnp.exp(-jnp.abs(l)))
    focal = ALPHA * (1.0 - jnp.exp(-bce)) ** GAMMA * bce
    return dice + jnp.mean(focal)


if __name__ == "__main__":
    key = jax.random.PRNGKey(0)
    k1, k2, k3, k4, k5, k6 = jax.random.split(key, 6)

    # 1) Lane-aligned NCHW input (single full-array block, default tiling).
    label = jax.random.normal(k1, (2, 4, 16, 16), dtype=jnp.float32)
    prediction = jax.nn.sigmoid(
        jax.random.normal(k2, (2, 4, 16, 16), dtype=jnp.float32))
    out = jax.block_until_ready(focal_dice_loss(label, prediction))
    ref = jax.block_until_ready(_reference(label, prediction))
    assert jnp.allclose(out, ref, rtol=1e-5, atol=1e-5), (out, ref)

    # 2) Lane-unaligned input: wrapper tail path + non-multiple-of-8
    #    full-array block fallback.
    label2 = jax.random.normal(k3, (3, 5, 7, 11), dtype=jnp.float32)
    prediction2 = jax.nn.sigmoid(
        jax.random.normal(k4, (3, 5, 7, 11), dtype=jnp.float32))
    out2 = jax.block_until_ready(focal_dice_loss(label2, prediction2))
    ref2 = jax.block_until_ready(_reference(label2, prediction2))
    assert jnp.allclose(out2, ref2, rtol=1e-5, atol=1e-5), (out2, ref2)

    # 3) Multi-block + 2-way split + partial trailing block + one padding
    #    grid iteration (5 blocks on a (2, 3) grid) + tail path.
    label3 = jax.random.normal(k5, (1, 3, 37, 41), dtype=jnp.float32)
    prediction3 = jax.nn.sigmoid(
        jax.random.normal(k6, (1, 3, 37, 41), dtype=jnp.float32))
    out3 = jax.block_until_ready(
        focal_dice_loss(label3, prediction3, block_rows=8))
    ref3 = jax.block_until_ready(_reference(label3, prediction3))
    assert jnp.allclose(out3, ref3, rtol=1e-5, atol=1e-5), (out3, ref3)

    # 4) Multi-block, exactly divisible split (mask-free multi-block path).
    label4 = jax.random.normal(k1, (4, 8, 32, 32), dtype=jnp.float32)
    prediction4 = jax.nn.sigmoid(
        jax.random.normal(k2, (4, 8, 32, 32), dtype=jnp.float32))
    out4 = jax.block_until_ready(
        focal_dice_loss(label4, prediction4, block_rows=64))
    ref4 = jax.block_until_ready(_reference(label4, prediction4))
    assert jnp.allclose(out4, ref4, rtol=1e-5, atol=1e-5), (out4, ref4)

    print("KERNEL_OK")
</pallas_src>

<mosaic_0001>
module attributes {stable_mosaic.version = 11 : i64} {
  func.func @_focal_dice_partial_kernel(%arg0: i32, %arg1: i32, %arg2: memref<16x128xf32, #tpu.memory_space<vmem>>, %arg3: memref<16x128xf32, #tpu.memory_space<vmem>>, %arg4: memref<1x32x128xf32, #tpu.memory_space<vmem>>) attributes {dimension_semantics = [#tpu.dimension_semantics<parallel>, #tpu.dimension_semantics<arbitrary>], iteration_bounds = array<i64: 1, 1>, scalar_prefetch = 0 : i64, scratch_operands = 0 : i64, tpu.core_type = #tpu.core_type<tc>, window_params = [{transform_indices = @transform_0, window_bounds = array<i64: 16, 128>}, {transform_indices = @transform_1, window_bounds = array<i64: 16, 128>}, {transform_indices = @transform_2, window_bounds = array<i64: 1, 32, 128>}]} {
    %c0_i32 = arith.constant 0 : i32
    %0 = arith.cmpi eq, %arg1, %c0_i32 : i32
    %1 = arith.extui %0 : i1 to i32
    %c0_i32_0 = arith.constant 0 : i32
    %2 = arith.cmpi ne, %1, %c0_i32_0 : i32
    scf.if %2 {
      %cst_32 = arith.constant 0.000000e+00 : f32
      %53 = vector.broadcast %cst_32 : f32 to vector<32x128xf32>
      %c0_33 = arith.constant 0 : index
      %c0_34 = arith.constant 0 : index
      %c0_35 = arith.constant 0 : index
      %54 = vector.load %arg4[%c0_33, %c0_34, %c0_35] : memref<1x32x128xf32, #tpu.memory_space<vmem>>, vector<1x32x128xf32>
      %55 = vector.shape_cast %54 : vector<1x32x128xf32> to vector<32x128xf32>
      %56 = vector.shape_cast %53 : vector<32x128xf32> to vector<1x32x128xf32>
      tpu.vector_store %arg4[%c0_33, %c0_34, %c0_35], %56 {strides = array<i32>} : memref<1x32x128xf32, #tpu.memory_space<vmem>>, vector<1x32x128xf32>,
    } else {
    }
    %c0 = arith.constant 0 : index
    %c0_1 = arith.constant 0 : index
    %3 = vector.load %arg2[%c0, %c0_1] : memref<16x128xf32, #tpu.memory_space<vmem>>, vector<16x128xf32>
    %c0_2 = arith.constant 0 : index
    %c0_3 = arith.constant 0 : index
    %4 = vector.load %arg3[%c0_2, %c0_3] : memref<16x128xf32, #tpu.memory_space<vmem>>, vector<16x128xf32>
    %5 = arith.mulf %3, %4 : vector<16x128xf32>
    %cst = arith.constant 0.000000e+00 : f32
    %6 = vector.broadcast %cst : f32 to vector<16x128xf32>
    %7 = arith.maximumf %3, %6 : vector<16x128xf32>
    %8 = arith.subf %7, %5 : vector<16x128xf32>
    %9 = math.absf %3 : vector<16x128xf32>
    %cst_4 = arith.constant 0.000000e+00 : f32
    %10 = vector.broadcast %cst_4 : f32 to vector<16x128xf32>
    %11 = arith.subf %10, %9 : vector<16x128xf32>
    %12 = math.exp %11 : vector<16x128xf32>
    %13 = math.log1p %12 : vector<16x128xf32>
    %14 = arith.addf %8, %13 : vector<16x128xf32>
    %cst_5 = arith.constant 0.000000e+00 : f32
    %15 = vector.broadcast %cst_5 : f32 to vector<16x128xf32>
    %16 = arith.subf %15, %14 : vector<16x128xf32>
    %17 = math.exp %16 : vector<16x128xf32>
    %cst_6 = arith.constant 1.000000e+00 : f32
    %18 = vector.broadcast %cst_6 : f32 to vector<16x128xf32>
    %19 = arith.subf %18, %17 : vector<16x128xf32>
    %20 = arith.mulf %19, %14 : vector<16x128xf32>
    %c0_7 = arith.constant 0 : index
    %c0_8 = arith.constant 0 : index
    %c0_9 = arith.constant 0 : index
    %21 = vector.load %arg4[%c0_7, %c0_8, %c0_9] : memref<1x32x128xf32, #tpu.memory_space<vmem>>, vector<1x8x128xf32>
    %22 = vector.shape_cast %21 : vector<1x8x128xf32> to vector<8x128xf32>
    %23 = vector.shape_cast %5 : vector<16x128xf32> to vector<2x8x128xf32>
    %cst_10 = arith.constant dense<0.000000e+00> : vector<8x128xf32>
    %24 = vector.multi_reduction <add>, %23, %cst_10 [0] : vector<2x8x128xf32> to vector<8x128xf32>
    %25 = arith.addf %22, %24 : vector<8x128xf32>
    %c0_11 = arith.constant 0 : index
    %c0_12 = arith.constant 0 : index
    %c0_13 = arith.constant 0 : index
    %26 = vector.load %arg4[%c0_11, %c0_12, %c0_13] : memref<1x32x128xf32, #tpu.memory_space<vmem>>, vector<1x8x128xf32>
    %27 = vector.shape_cast %26 : vector<1x8x128xf32> to vector<8x128xf32>
    %28 = vector.shape_cast %25 : vector<8x128xf32> to vector<1x8x128xf32>
    tpu.vector_store %arg4[%c0_11, %c0_12, %c0_13], %28 {strides = array<i32>} : memref<1x32x128xf32, #tpu.memory_space<vmem>>, vector<1x8x128xf32>,
    %c0_14 = arith.constant 0 : index
    %c8 = arith.constant 8 : index
    %c0_15 = arith.constant 0 : index
    %29 = vector.load %arg4[%c0_14, %c8, %c0_15] : memref<1x32x128xf32, #tpu.memory_space<vmem>>, vector<1x8x128xf32>
    %30 = vector.shape_cast %29 : vector<1x8x128xf32> to vector<8x128xf32>
    %31 = vector.shape_cast %3 : vector<16x128xf32> to vector<2x8x128xf32>
    %cst_16 = arith.constant dense<0.000000e+00> : vector<8x128xf32>
    %32 = vector.multi_reduction <add>, %31, %cst_16 [0] : vector<2x8x128xf32> to vector<8x128xf32>
    %33 = arith.addf %30, %32 : vector<8x128xf32>
    %c0_17 = arith.constant 0 : index
    %c8_18 = arith.constant 8 : index
    %c0_19 = arith.constant 0 : index
    %34 = vector.load %arg4[%c0_17, %c8_18, %c0_19] : memref<1x32x128xf32, #tpu.memory_space<vmem>>, vector<1x8x128xf32>
    %35 = vector.shape_cast %34 : vector<1x8x128xf32> to vector<8x128xf32>
    %36 = vector.shape_cast %33 : vector<8x128xf32> to vector<1x8x128xf32>
    tpu.vector_store %arg4[%c0_17, %c8_18, %c0_19], %36 {strides = array<i32>} : memref<1x32x128xf32, #tpu.memory_space<vmem>>, vector<1x8x128xf32>,
    %c0_20 = arith.constant 0 : index
    %c16 = arith.constant 16 : index
    %c0_21 = arith.constant 0 : index
    %37 = vector.load %arg4[%c0_20, %c16, %c0_21] : memref<1x32x128xf32, #tpu.memory_space<vmem>>, vector<1x8x128xf32>
    %38 = vector.shape_cast %37 : vector<1x8x128xf32> to vector<8x128xf32>
    %39 = vector.shape_cast %4 : vector<16x128xf32> to vector<2x8x128xf32>
    %cst_22 = arith.constant dense<0.000000e+00> : vector<8x128xf32>
    %40 = vector.multi_reduction <add>, %39, %cst_22 [0] : vector<2x8x128xf32> to vector<8x128xf32>
    %41 = arith.addf %38, %40 : vector<8x128xf32>
    %c0_23 = arith.constant 0 : index
    %c16_24 = arith.constant 16 : index
    %c0_25 = arith.constant 0 : index
    %42 = vector.load %arg4[%c0_23, %c16_24, %c0_25] : memref<1x32x128xf32, #tpu.memory_space<vmem>>, vector<1x8x128xf32>
    %43 = vector.shape_cast %42 : vector<1x8x128xf32> to vector<8x128xf32>
    %44 = vector.shape_cast %41 : vector<8x128xf32> to vector<1x8x128xf32>
    tpu.vector_store %arg4[%c0_23, %c16_24, %c0_25], %44 {strides = array<i32>} : memref<1x32x128xf32, #tpu.memory_space<vmem>>, vector<1x8x128xf32>,
    %c0_26 = arith.constant 0 : index
    %c24 = arith.constant 24 : index
    %c0_27 = arith.constant 0 : index
    %45 = vector.load %arg4[%c0_26, %c24, %c0_27] : memref<1x32x128xf32, #tpu.memory_space<vmem>>, vector<1x8x128xf32>
    %46 = vector.shape_cast %45 : vector<1x8x128xf32> to vector<8x128xf32>
    %47 = vector.shape_cast %20 : vector<16x128xf32> to vector<2x8x128xf32>
    %cst_28 = arith.constant dense<0.000000e+00> : vector<8x128xf32>
    %48 = vector.multi_reduction <add>, %47, %cst_28 [0] : vector<2x8x128xf32> to vector<8x128xf32>
    %49 = arith.addf %46, %48 : vector<8x128xf32>
    %c0_29 = arith.constant 0 : index
    %c24_30 = arith.constant 24 : index
    %c0_31 = arith.constant 0 : index
    %50 = vector.load %arg4[%c0_29, %c24_30, %c0_31] : memref<1x32x128xf32, #tpu.memory_space<vmem>>, vector<1x8x128xf32>
    %51 = vector.shape_cast %50 : vector<1x8x128xf32> to vector<8x128xf32>
    %52 = vector.shape_cast %49 : vector<8x128xf32> to vector<1x8x128xf32>
    tpu.vector_store %arg4[%c0_29, %c24_30, %c0_31], %52 {strides = array<i32>} : memref<1x32x128xf32, #tpu.memory_space<vmem>>, vector<1x8x128xf32>,
    return
  }
  func.func @transform_0(%arg0: i32, %arg1: i32) -> (i32, i32) {
    %c1_i32 = arith.constant 1 : i32
    %0 = arith.muli %arg0, %c1_i32 : i32
    %1 = arith.addi %0, %arg1 : i32
    %c0_i32 = arith.constant 0 : i32
    %c0_i32_0 = arith.constant 0 : i32
    return %1, %c0_i32 : i32, i32
  }
  func.func @transform_1(%arg0: i32, %arg1: i32) -> (i32, i32) {
    %c1_i32 = arith.constant 1 : i32
    %0 = arith.muli %arg0, %c1_i32 : i32
    %1 = arith.addi %0, %arg1 : i32
    %c0_i32 = arith.constant 0 : i32
    %c0_i32_0 = arith.constant 0 : i32
    return %1, %c0_i32 : i32, i32
  }
  func.func @transform_2(%arg0: i32, %arg1: i32) -> (i32, i32, i32) {
    %c0_i32 = arith.constant 0 : i32
    %c0_i32_0 = arith.constant 0 : i32
    %c0_i32_1 = arith.constant 0 : i32
    return %arg0, %c0_i32, %c0_i32_0 : i32, i32, i32
  }
}

</mosaic_0001>

<llo_original>
// kernel: tpu_custom_call.1
$region0: #{tpu_custom_call.1}
  #allocation0 [shape = 'u32[]', space=smem, size = 0x4, offset = 0x4, fixed_abs, tag = 'smem constant byte address 0x4 - core index']
  #allocation1 [shape = 'u32[72,128]{1,0:T(1,128)}', space=vmem, size = 0x9000, scoped, tag = 'internal scratch']
  %s0 = inlined_call_operand.hbm [shape: f32[16,128], index: 0, kind: input, shape index: {}]
  %s1 = inlined_call_operand.hbm [shape: f32[16,128], index: 1, kind: input, shape index: {}]
  %s2 = inlined_call_operand.hbm [shape: f32[1,32,128], index: 2, kind: output, shape index: {}]
  %s3 = sld [smem:[#allocation0]]
  $region30: #{tpu_custom_call.1} parent=0
    _
  %s5 = ssub.s32 1, %s3
  %s6 = scalar_select 0, %s5, %s3
  $region1: #{tpu_custom_call.1} parent=0
    #allocation2 [shape = 'u8[8192]{0}', space=vmem, size = 0x2000, scoped, tag = 'input window, operand 0, single buffered']
    #allocation3 [shape = 's32[1]{0}', space=sflag, size = 0x4, scoped, tag = 'scoped memory for tpu_custom_call.1']
    #allocation4 [shape = 's32[1]{0}', space=sflag, size = 0x4, scoped, tag = 'scoped memory for tpu_custom_call.1']
    #allocation5 [shape = 'u8[8192]{0}', space=vmem, size = 0x2000, scoped, tag = 'input window, operand 1, single buffered']
    #allocation6 [shape = 's32[1]{0}', space=sflag, size = 0x4, scoped, tag = 'scoped memory for tpu_custom_call.1']
    #allocation7 [shape = 'u8[16384]{0}', space=vmem, size = 0x4000, scoped, tag = 'output window, operand 0, single buffered']
    %7 = vsyncpa [#allocation3], 0
    %8 = vsyncpa [#allocation6], 0
    %9 = vsyncpa [#allocation4], 0
    // Predicated region
    $region2: #{tpu_custom_call.1} parent=1 // pred_check
      _
    $region3: #{tpu_custom_call.1} parent=1 // pred_check_branch
      %11 = sbr.rel (0) target = $region5
    $region4: #{tpu_custom_call.1} parent=1 // pred_region
      %s12 = sadd.s32 0, 0
      %s13 = smul.u32 2, %s12
      %15 = vsyncadd [#allocation3], 0
      %s16 = smul.addr %s13, 8
      %s17 = scalar_lea.hbm %s0, %s16
      %s18 = sshll.u32 %s17, 4
      %s19 = int_to_ptr.hbm [resolvable:$true] %s18
      %s20 = sshll.u32 [#allocation2], 4
      %s21 = int_to_ptr.vmem [resolvable:$true] %s20
      %26 = dma.hbm_to_vmem [thread:$0]  %s19, 256, %s21, [#allocation3], 128, 128, 8
    $region5: #{tpu_custom_call.1} parent=1 // pred_fallthru
      _
    // Predicated region
    $region6: #{tpu_custom_call.1} parent=1 // pred_check
      _
    $region7: #{tpu_custom_call.1} parent=1 // pred_check_branch
      %28 = sbr.rel (0) target = $region9
    $region8: #{tpu_custom_call.1} parent=1 // pred_region
      %s29 = sadd.s32 0, 0
      %s30 = smul.u32 2, %s29
      %32 = vsyncadd [#allocation6], 0
      %s33 = smul.addr %s30, 8
      %s34 = scalar_lea.hbm %s1, %s33
      %s35 = sshll.u32 %s34, 4
      %s36 = int_to_ptr.hbm [resolvable:$true] %s35
      %s37 = sshll.u32 [#allocation5], 4
      %s38 = int_to_ptr.vmem [resolvable:$true] %s37
      %43 = dma.hbm_to_vmem [thread:$0]  %s36, 256, %s38, [#allocation6], 128, 128, 8
    $region9: #{tpu_custom_call.1} parent=1 // pred_fallthru
      _
    // Predicated region
    $region10: #{tpu_custom_call.1} parent=1 // pred_check
      _
    $region11: #{tpu_custom_call.1} parent=1 // pred_check_branch
      %45 = sbr.rel (0) target = $region13
    $region12: #{tpu_custom_call.1} parent=1 // pred_region
      %47 = dma.done [#allocation3], 256
    $region13: #{tpu_custom_call.1} parent=1 // pred_fallthru
      _
    // Predicated region
    $region14: #{tpu_custom_call.1} parent=1 // pred_check
      _
    $region15: #{tpu_custom_call.1} parent=1 // pred_check_branch
      %49 = sbr.rel (0) target = $region17
    $region16: #{tpu_custom_call.1} parent=1 // pred_region
      %51 = dma.done [#allocation6], 256
    $region17: #{tpu_custom_call.1} parent=1 // pred_fallthru
      _
    %s52 = sadd.s32 0, 0
    %s53 = smul.u32 2, %s52
    %s54 = sadd.s32 0, 0
    %s55 = smul.u32 2, %s54
    %p56 = scmp.eq.s32.totalorder 0, 0
    // Predicated region
    $region18: #{tpu_custom_call.1} parent=1 // pred_check
      %p57 = pneg %p56
    $region19: #{tpu_custom_call.1} parent=1 // pred_check_branch
      %59 = sbr.rel (%p57) target = $region21
    $region20: #{tpu_custom_call.1} parent=1 // pred_region
      %60 = vst [vmem:[#allocation7] sm:$0xff] 0.0
      %61 = vst [vmem:[#allocation7 + $0x8] sm:$0xff] 0.0
      %62 = vst [vmem:[#allocation7 + $0x10] sm:$0xff] 0.0
      %63 = vst [vmem:[#allocation7 + $0x18] sm:$0xff] 0.0
    $region21: #{tpu_custom_call.1} parent=1 // pred_fallthru
      _
    %v64 = vld [vmem:[#allocation2] sm:$0xff]
    %v65 = vld [vmem:[#allocation2 + $0x8] sm:$0xff]
    %v66 = vld [vmem:[#allocation5] sm:$0xff]
    %v67 = vld [vmem:[#allocation5 + $0x8] sm:$0xff]
    %v68 = vmul.f32 %v64, %v66
    %v69 = vmul.f32 %v65, %v67
    %v70 = vmax.f32 %v64, 0.0
    %v71 = vmax.f32 %v65, 0.0
    %v72 = vsub.f32 %v70, %v68
    %v73 = vsub.f32 %v71, %v69
    %v74 = vand.u32 2147483647, %v64
    %v75 = vand.u32 2147483647, %v65
    %v76 = vsub.f32 0.0, %v74
    %v77 = vsub.f32 0.0, %v75
    %v78 = vmul.f32 %v76, 1.442695
    %v79 = vpow.pop %v78
    %v80 = vmul.f32 %v77, 1.442695
    %v81 = vpow.pop %v80
    %v82 = vadd.f32 %v79, 1.0
    %v83 = vlog2.pop %v82
    %v84 = vmul.f32 %v83, 0.6931472
    %v85 = vmul.f32 -0.5, %v79
    %v86 = vadd.f32 %v85, 1.0
    %v87 = vmul.f32 %v86, %v79
    %v88 = vand.u32 2147483647, %v79
    %vm89 = vcmp.lt.f32.partialorder %v88, 0.0004427343
    %v90 = vsel %vm89, %v87, %v84
    %v91 = vadd.f32 %v81, 1.0
    %v92 = vlog2.pop %v91
    %v93 = vmul.f32 %v92, 0.6931472
    %v94 = vmul.f32 -0.5, %v81
    %v95 = vadd.f32 %v94, 1.0
    %v96 = vmul.f32 %v95, %v81
    %v97 = vand.u32 2147483647, %v81
    %vm98 = vcmp.lt.f32.partialorder %v97, 0.0004427343
    %v99 = vsel %vm98, %v96, %v93
    %v100 = vadd.f32 %v72, %v90
    %v101 = vadd.f32 %v73, %v99
    %v102 = vsub.f32 0.0, %v100
    %v103 = vsub.f32 0.0, %v101
    %v104 = vmul.f32 %v102, 1.442695
    %v105 = vpow.pop %v104
    %v106 = vmul.f32 %v103, 1.442695
    %v107 = vpow.pop %v106
    %v108 = vsub.f32 1.0, %v105
    %v109 = vsub.f32 1.0, %v107
    %v110 = vmul.f32 %v108, %v100
    %v111 = vmul.f32 %v109, %v101
    %v112 = vld [vmem:[#allocation7] sm:$0xff]
    %v113 = vadd.f32 %v68, %v69
    %v114 = vadd.f32 %v112, %v113
    %115 = vst [vmem:[#allocation7] sm:$0xff] %v114
    %v116 = vld [vmem:[#allocation7 + $0x8] sm:$0xff]
    %v117 = vadd.f32 %v64, %v65
    %v118 = vadd.f32 %v116, %v117
    %119 = vst [vmem:[#allocation7 + $0x8] sm:$0xff] %v118
    %v120 = vld [vmem:[#allocation7 + $0x10] sm:$0xff]
    %v121 = vadd.f32 %v66, %v67
    %v122 = vadd.f32 %v120, %v121
    %123 = vst [vmem:[#allocation7 + $0x10] sm:$0xff] %v122
    %v124 = vld [vmem:[#allocation7 + $0x18] sm:$0xff]
    %v125 = vadd.f32 %v110, %v111
    %v126 = vadd.f32 %v124, %v125
    %127 = vst [vmem:[#allocation7 + $0x18] sm:$0xff] %v126
    // Predicated region
    $region22: #{tpu_custom_call.1} parent=1 // pred_check
      _
    $region23: #{tpu_custom_call.1} parent=1 // pred_check_branch
      %129 = sbr.rel (0) target = $region25
    $region24: #{tpu_custom_call.1} parent=1 // pred_region
      %131 = vsyncadd [#allocation4], 0
      %s132 = sshll.u32 [#allocation7], 4
      %s133 = int_to_ptr.vmem [resolvable:$true] %s132
      %s134 = sshll.u32 %s2, 4
      %s135 = int_to_ptr.hbm [resolvable:$true] %s134
      %140 = dma.vmem_to_hbm [thread:$0]  %s133, 512, %s135, [#allocation4], 128, 128, 8
    $region25: #{tpu_custom_call.1} parent=1 // pred_fallthru
      _
    // Predicated region
    $region26: #{tpu_custom_call.1} parent=1 // pred_check
      _
    $region27: #{tpu_custom_call.1} parent=1 // pred_check_branch
      %142 = sbr.rel (0) target = $region29
    $region28: #{tpu_custom_call.1} parent=1 // pred_region
      %144 = dma.done [#allocation4], 512
    $region29: #{tpu_custom_call.1} parent=1 // pred_fallthru
      _
    %145 = vsyncpa [#allocation3], 1
    %146 = vsyncpa [#allocation6], 1
    %147 = vsyncpa [#allocation4], 1

</llo_original>
